<compile_context>
chip_gen: v6e
topology: v6e:2x2x1
jax: 0.10.0
libtpu: 0.0.40
codegen_flags: <defaults>
</compile_context>

<pallas_src>
import math

import jax
import jax.numpy as jnp
from jax.experimental import pallas as pl
from jax.experimental.pallas import tpu as pltpu


def _round_up(x: int, m: int) -> int:
    return (x + m - 1) // m * m


def _make_studentt_kernel(dof: float):
    dof = float(dof)
    coef = -0.5 * (dof + 1.0)
    inv_dof = 1.0 / dof

    def kernel(ipred_ref, aux_ref, out_ref):
        x = ipred_ref[...]                 # (tm, ts): rows = reflections, lanes = samples
        loc = aux_ref[:, 0:1]              # (tm, 1)
        inv_scale = aux_ref[:, 1:2]        # (tm, 1) = 1/SigIobs
        row_c = aux_ref[:, 2:3]            # (tm, 1) = -(log(SigIobs) + z_const)

        y = (x - loc) * inv_scale          # lane-broadcast of per-row constants (cheap)
        ll = coef * jnp.log1p((y * y) * inv_dof) + row_c
        out_ref[...] = ll.astype(out_ref.dtype)

    return kernel


def studentt_likelihood(Ipred, Iobs, SigIobs, dof: float, *,
                        block_bytes: int = 4 << 20, out_dtype=jnp.float32):
    """Pallas implementation of StudentTLikelihood(dof).forward(Ipred, Iobs, SigIobs).

    Returns an (N, S) array of log-likelihoods, identical semantics to the
    torch module (which broadcasts (N,1) loc/scale against (N,S) Ipred).
    """
    Ipred = jnp.asarray(Ipred, jnp.float32)          # (N, S), streamed as-is
    Iobs = jnp.asarray(Iobs, jnp.float32).reshape(-1)       # (N,)
    SigIobs = jnp.asarray(SigIobs, jnp.float32).reshape(-1)  # (N,)

    N, S = Ipred.shape

    # ---- Tile sizing (natural layout, no transposes) -------------------------
    # Sample axis: keep the full S (contiguous row-major DMA) unless even an
    # 8-row block would exceed the byte budget; then tile S in multiples of 128.
    if 8 * S * 4 <= block_bytes:
        ts = S
    else:
        ts = max(128, (block_bytes // (8 * 4)) // 128 * 128)
        ts = min(ts, _round_up(S, 128))
    # Row axis: multiple of 8, sized to ~block_bytes per Ipred block.
    tm = max(8, (block_bytes // (ts * 4)) // 8 * 8)
    tm = min(tm, _round_up(N, 8))

    grid = (pl.cdiv(N, tm), pl.cdiv(S, ts))          # ragged last blocks handled by Pallas

    # ---- Per-row constants precomputed once (tiny, fused by XLA) -------------
    z_const = (0.5 * math.log(dof)
               + 0.5 * math.log(math.pi)
               + math.lgamma(0.5 * dof)
               - math.lgamma(0.5 * (dof + 1.0)))
    inv_scale = 1.0 / SigIobs
    row_c = -(jnp.log(SigIobs) + z_const)
    aux = jnp.stack([Iobs, inv_scale, row_c], axis=1)  # (N, 3): one small DMA per step

    kernel = _make_studentt_kernel(dof)

    # ---- Explicit VMEM budget (double-buffered working set + slack) ----------
    out_itemsize = jnp.dtype(out_dtype).itemsize
    block_in = tm * ts * 4
    block_out = tm * ts * out_itemsize
    block_aux = tm * 3 * 4
    vmem_limit = 2 * (block_in + block_out + block_aux) + (4 << 20)
    vmem_limit = int(min(max(vmem_limit, 16 << 20), 48 << 20))  # fits v7x 64 MiB physical

    cost = pl.CostEstimate(
        flops=5 * N * S,
        transcendentals=N * S,                       # one log1p per element
        bytes_accessed=4 * N * S + out_itemsize * N * S + 12 * N,
    )

    out = pl.pallas_call(
        kernel,
        out_shape=jax.ShapeDtypeStruct((N, S), out_dtype),
        grid_spec=pl.GridSpec(
            grid=grid,
            in_specs=[
                pl.BlockSpec((tm, ts), lambda i, j: (i, j)),  # Ipred tile (natural layout)
                pl.BlockSpec((tm, 3), lambda i, j: (i, 0)),   # packed [loc, 1/scale, row_c]
            ],
            out_specs=pl.BlockSpec((tm, ts), lambda i, j: (i, j)),
        ),
        compiler_params=pltpu.CompilerParams(
            dimension_semantics=("parallel", "parallel"),  # megacore-shardable on v7x
            vmem_limit_bytes=vmem_limit,
        ),
        cost_estimate=cost,
    )(Ipred, aux)

    return out


def _reference(Ipred, Iobs, SigIobs, dof):
    """Pure-JAX reference (mirrors torch.distributions.StudentT.log_prob)."""
    if Iobs.ndim == 1:
        Iobs = Iobs[:, None]
    if SigIobs.ndim == 1:
        SigIobs = SigIobs[:, None]
    y = (Ipred - Iobs) / SigIobs
    Z = (jnp.log(SigIobs)
         + 0.5 * math.log(dof)
         + 0.5 * math.log(math.pi)
         + math.lgamma(0.5 * dof)
         - math.lgamma(0.5 * (dof + 1.0)))
    return -0.5 * (dof + 1.0) * jnp.log1p(y * y / dof) - Z


if __name__ == "__main__":
    # Module "parameters": just the degrees of freedom, fixed deterministically.
    dof = 4.0

    key = jax.random.PRNGKey(0)
    k1, k2, k3 = jax.random.split(key, 3)

    N, S = 64, 16  # 64 reflections, 16 MC samples of Ipred per reflection
    Iobs = jax.random.normal(k1, (N,), jnp.float32) * 5.0 + 10.0
    SigIobs = jax.random.uniform(k2, (N,), jnp.float32, minval=0.5, maxval=2.0)
    Ipred = (Iobs[:, None]
             + SigIobs[:, None] * jax.random.normal(k3, (N, S), jnp.float32))

    out = studentt_likelihood(Ipred, Iobs, SigIobs, dof)
    out = jax.block_until_ready(out)

    ref = _reference(Ipred, Iobs, SigIobs, dof)
    assert out.shape == (N, S)
    assert jnp.allclose(out, ref, atol=1e-5, rtol=1e-5), "mismatch vs reference"

    print("KERNEL_OK")
</pallas_src>

<mosaic_0001>
module attributes {stable_mosaic.version = 11 : i64} {
  func.func @kernel(%arg0: i32, %arg1: i32, %arg2: memref<64x16xf32, #tpu.memory_space<vmem>>, %arg3: memref<64x3xf32, #tpu.memory_space<vmem>>, %arg4: memref<64x16xf32, #tpu.memory_space<vmem>>) attributes {dimension_semantics = [#tpu.dimension_semantics<parallel>, #tpu.dimension_semantics<parallel>], iteration_bounds = array<i64: 1, 1>, scalar_prefetch = 0 : i64, scratch_operands = 0 : i64, tpu.core_type = #tpu.core_type<tc>, window_params = [{transform_indices = @transform_0, window_bounds = array<i64: 64, 16>}, {transform_indices = @transform_1, window_bounds = array<i64: 64, 3>}, {transform_indices = @transform_2, window_bounds = array<i64: 64, 16>}]} {
    %c0 = arith.constant 0 : index
    %c0_0 = arith.constant 0 : index
    %0 = vector.load %arg2[%c0, %c0_0] : memref<64x16xf32, #tpu.memory_space<vmem>>, vector<64x16xf32>
    %c0_1 = arith.constant 0 : index
    %c0_2 = arith.constant 0 : index
    %1 = vector.load %arg3[%c0_1, %c0_2] : memref<64x3xf32, #tpu.memory_space<vmem>>, vector<64x1xf32>
    %c0_3 = arith.constant 0 : index
    %c1 = arith.constant 1 : index
    %2 = vector.load %arg3[%c0_3, %c1] : memref<64x3xf32, #tpu.memory_space<vmem>>, vector<64x1xf32>
    %c0_4 = arith.constant 0 : index
    %c2 = arith.constant 2 : index
    %3 = vector.load %arg3[%c0_4, %c2] : memref<64x3xf32, #tpu.memory_space<vmem>>, vector<64x1xf32>
    %4 = vector.broadcast %1 : vector<64x1xf32> to vector<64x16xf32>
    %5 = arith.subf %0, %4 : vector<64x16xf32>
    %6 = vector.broadcast %2 : vector<64x1xf32> to vector<64x16xf32>
    %7 = arith.mulf %5, %6 : vector<64x16xf32>
    %8 = arith.mulf %7, %7 : vector<64x16xf32>
    %cst = arith.constant 2.500000e-01 : f32
    %9 = vector.broadcast %cst : f32 to vector<64x16xf32>
    %10 = arith.mulf %8, %9 : vector<64x16xf32>
    %11 = math.log1p %10 : vector<64x16xf32>
    %cst_5 = arith.constant -2.500000e+00 : f32
    %12 = vector.broadcast %cst_5 : f32 to vector<64x16xf32>
    %13 = arith.mulf %12, %11 : vector<64x16xf32>
    %14 = vector.broadcast %3 : vector<64x1xf32> to vector<64x16xf32>
    %15 = arith.addf %13, %14 : vector<64x16xf32>
    %c0_6 = arith.constant 0 : index
    %c0_7 = arith.constant 0 : index
    %16 = vector.load %arg4[%c0_6, %c0_7] : memref<64x16xf32, #tpu.memory_space<vmem>>, vector<64x16xf32>
    tpu.vector_store %arg4[%c0_6, %c0_7], %15 {strides = array<i32>} : memref<64x16xf32, #tpu.memory_space<vmem>>, vector<64x16xf32>,
    return
  }
  func.func @transform_0(%arg0: i32, %arg1: i32) -> (i32, i32) {
    %c0_i32 = arith.constant 0 : i32
    return %arg0, %arg1 : i32, i32
  }
  func.func @transform_1(%arg0: i32, %arg1: i32) -> (i32, i32) {
    %c0_i32 = arith.constant 0 : i32
    %c0_i32_0 = arith.constant 0 : i32
    return %arg0, %c0_i32 : i32, i32
  }
  func.func @transform_2(%arg0: i32, %arg1: i32) -> (i32, i32) {
    %c0_i32 = arith.constant 0 : i32
    return %arg0, %arg1 : i32, i32
  }
}

</mosaic_0001>

<llo_original>
// kernel: tpu_custom_call.1
$region0: #{tpu_custom_call.1}
  #allocation0 [shape = 'u32[]', space=smem, size = 0x4, offset = 0x4, fixed_abs, tag = 'smem constant byte address 0x4 - core index']
  #allocation1 [shape = 'u32[144,128]{1,0:T(1,128)}', space=vmem, size = 0x12000, scoped, tag = 'internal scratch']
  %s0 = inlined_call_operand.vmem [shape: f32[64,16], index: 0, kind: input, shape index: {}]
  %s1 = inlined_call_operand.vmem [shape: f32[64,3], index: 1, kind: input, shape index: {}]
  %s2 = inlined_call_operand.vmem [shape: f32[64,16], index: 2, kind: output, shape index: {}]
  %s3 = sld [smem:[#allocation0]]
  $region18: #{tpu_custom_call.1} parent=0
    _
  %s5 = ssub.s32 1, %s3
  %s6 = scalar_select 0, %s5, %s3
  // Predicated region
  $region2: #{tpu_custom_call.1} parent=0 // pred_check
    _
  $region3: #{tpu_custom_call.1} parent=0 // pred_check_branch
    %8 = sbr.rel (0) target = $region5
  $region4: #{tpu_custom_call.1} parent=0 // pred_region
    _
  $region5: #{tpu_custom_call.1} parent=0 // pred_fallthru
    _
  // Predicated region
  $region6: #{tpu_custom_call.1} parent=0 // pred_check
    _
  $region7: #{tpu_custom_call.1} parent=0 // pred_check_branch
    %10 = sbr.rel (0) target = $region9
  $region8: #{tpu_custom_call.1} parent=0 // pred_region
    _
  $region9: #{tpu_custom_call.1} parent=0 // pred_fallthru
    _
  %v11 = vld [vmem:[%s0] sm:$0xff]
  %v12 = vld [vmem:[%s0 + $0x8] sm:$0xff]
  %v13 = vld [vmem:[%s0 + $0x10] sm:$0xff]
  %v14 = vld [vmem:[%s0 + $0x18] sm:$0xff]
  %v15 = vld [vmem:[%s0 + $0x20] sm:$0xff]
  %v16 = vld [vmem:[%s0 + $0x28] sm:$0xff]
  %v17 = vld [vmem:[%s0 + $0x30] sm:$0xff]
  %v18 = vld [vmem:[%s0 + $0x38] sm:$0xff]
  %v19 = vld [vmem:[%s1] sm:$0xff]
  %v20 = vld [vmem:[%s1 + $0x8] sm:$0xff]
  %v21 = vld [vmem:[%s1 + $0x10] sm:$0xff]
  %v22 = vld [vmem:[%s1 + $0x18] sm:$0xff]
  %v23 = vld [vmem:[%s1 + $0x20] sm:$0xff]
  %v24 = vld [vmem:[%s1 + $0x28] sm:$0xff]
  %v25 = vld [vmem:[%s1 + $0x30] sm:$0xff]
  %v26 = vld [vmem:[%s1 + $0x38] sm:$0xff]
  %28 = vset.pattern.permute.xlu0 0
  %29 = vperm.xlu0 %28, %v19
  %v30 = vpop.permute.xlu0 %29
  %33 = vset.pattern.permute.xlu0 0
  %34 = vperm.xlu0 %33, %v20
  %v35 = vpop.permute.xlu0 %34
  %38 = vset.pattern.permute.xlu0 0
  %39 = vperm.xlu0 %38, %v21
  %v40 = vpop.permute.xlu0 %39
  %43 = vset.pattern.permute.xlu0 0
  %44 = vperm.xlu0 %43, %v22
  %v45 = vpop.permute.xlu0 %44
  %48 = vset.pattern.permute.xlu0 0
  %49 = vperm.xlu0 %48, %v23
  %v50 = vpop.permute.xlu0 %49
  %53 = vset.pattern.permute.xlu0 0
  %54 = vperm.xlu0 %53, %v24
  %v55 = vpop.permute.xlu0 %54
  %58 = vset.pattern.permute.xlu0 0
  %59 = vperm.xlu0 %58, %v25
  %v60 = vpop.permute.xlu0 %59
  %63 = vset.pattern.permute.xlu0 0
  %64 = vperm.xlu0 %63, %v26
  %v65 = vpop.permute.xlu0 %64
  %v67 = vsub.f32 %v11, %v30
  %v68 = vsub.f32 %v12, %v35
  %v69 = vsub.f32 %v13, %v40
  %v70 = vsub.f32 %v14, %v45
  %v71 = vsub.f32 %v15, %v50
  %v72 = vsub.f32 %v16, %v55
  %v73 = vsub.f32 %v17, %v60
  %v74 = vsub.f32 %v18, %v65
  %75 = vset.pattern.permute.xlu0 1
  %76 = vperm.xlu0 %75, %v19
  %v77 = vpop.permute.xlu0 %76
  %79 = vset.pattern.permute.xlu0 1
  %80 = vperm.xlu0 %79, %v20
  %v81 = vpop.permute.xlu0 %80
  %83 = vset.pattern.permute.xlu0 1
  %84 = vperm.xlu0 %83, %v21
  %v85 = vpop.permute.xlu0 %84
  %87 = vset.pattern.permute.xlu0 1
  %88 = vperm.xlu0 %87, %v22
  %v89 = vpop.permute.xlu0 %88
  %91 = vset.pattern.permute.xlu0 1
  %92 = vperm.xlu0 %91, %v23
  %v93 = vpop.permute.xlu0 %92
  %95 = vset.pattern.permute.xlu0 1
  %96 = vperm.xlu0 %95, %v24
  %v97 = vpop.permute.xlu0 %96
  %99 = vset.pattern.permute.xlu0 1
  %100 = vperm.xlu0 %99, %v25
  %v101 = vpop.permute.xlu0 %100
  %103 = vset.pattern.permute.xlu0 1
  %104 = vperm.xlu0 %103, %v26
  %v105 = vpop.permute.xlu0 %104
  %v107 = vmul.f32 %v67, %v77
  %v108 = vmul.f32 %v68, %v81
  %v109 = vmul.f32 %v69, %v85
  %v110 = vmul.f32 %v70, %v89
  %v111 = vmul.f32 %v71, %v93
  %v112 = vmul.f32 %v72, %v97
  %v113 = vmul.f32 %v73, %v101
  %v114 = vmul.f32 %v74, %v105
  %v115 = vmul.f32 %v107, %v107
  %v116 = vmul.f32 %v108, %v108
  %v117 = vmul.f32 %v109, %v109
  %v118 = vmul.f32 %v110, %v110
  %v119 = vmul.f32 %v111, %v111
  %v120 = vmul.f32 %v112, %v112
  %v121 = vmul.f32 %v113, %v113
  %v122 = vmul.f32 %v114, %v114
  %v123 = vmul.f32 %v115, 0.25
  %v124 = vmul.f32 %v116, 0.25
  %v125 = vmul.f32 %v117, 0.25
  %v126 = vmul.f32 %v118, 0.25
  %v127 = vmul.f32 %v119, 0.25
  %v128 = vmul.f32 %v120, 0.25
  %v129 = vmul.f32 %v121, 0.25
  %v130 = vmul.f32 %v122, 0.25
  %v131 = vadd.f32 %v123, 1.0
  %v132 = vlog2.pop %v131
  %v133 = vmul.f32 %v132, 0.6931472
  %v134 = vmul.f32 -0.5, %v123
  %v135 = vadd.f32 %v134, 1.0
  %v136 = vmul.f32 %v135, %v123
  %v137 = vand.u32 2147483647, %v123
  %vm138 = vcmp.lt.f32.partialorder %v137, 0.0004427343
  %v139 = vsel %vm138, %v136, %v133
  %v140 = vadd.f32 %v124, 1.0
  %v141 = vlog2.pop %v140
  %v142 = vmul.f32 %v141, 0.6931472
  %v143 = vmul.f32 -0.5, %v124
  %v144 = vadd.f32 %v143, 1.0
  %v145 = vmul.f32 %v144, %v124
  %v146 = vand.u32 2147483647, %v124
  %vm147 = vcmp.lt.f32.partialorder %v146, 0.0004427343
  %v148 = vsel %vm147, %v145, %v142
  %v149 = vadd.f32 %v125, 1.0
  %v150 = vlog2.pop %v149
  %v151 = vmul.f32 %v150, 0.6931472
  %v152 = vmul.f32 -0.5, %v125
  %v153 = vadd.f32 %v152, 1.0
  %v154 = vmul.f32 %v153, %v125
  %v155 = vand.u32 2147483647, %v125
  %vm156 = vcmp.lt.f32.partialorder %v155, 0.0004427343
  %v157 = vsel %vm156, %v154, %v151
  %v158 = vadd.f32 %v126, 1.0
  %v159 = vlog2.pop %v158
  %v160 = vmul.f32 %v159, 0.6931472
  %v161 = vmul.f32 -0.5, %v126
  %v162 = vadd.f32 %v161, 1.0
  %v163 = vmul.f32 %v162, %v126
  %v164 = vand.u32 2147483647, %v126
  %vm165 = vcmp.lt.f32.partialorder %v164, 0.0004427343
  %v166 = vsel %vm165, %v163, %v160
  %v167 = vadd.f32 %v127, 1.0
  %v168 = vlog2.pop %v167
  %v169 = vmul.f32 %v168, 0.6931472
  %v170 = vmul.f32 -0.5, %v127
  %v171 = vadd.f32 %v170, 1.0
  %v172 = vmul.f32 %v171, %v127
  %v173 = vand.u32 2147483647, %v127
  %vm174 = vcmp.lt.f32.partialorder %v173, 0.0004427343
  %v175 = vsel %vm174, %v172, %v169
  %v176 = vadd.f32 %v128, 1.0
  %v177 = vlog2.pop %v176
  %v178 = vmul.f32 %v177, 0.6931472
  %v179 = vmul.f32 -0.5, %v128
  %v180 = vadd.f32 %v179, 1.0
  %v181 = vmul.f32 %v180, %v128
  %v182 = vand.u32 2147483647, %v128
  %vm183 = vcmp.lt.f32.partialorder %v182, 0.0004427343
  %v184 = vsel %vm183, %v181, %v178
  %v185 = vadd.f32 %v129, 1.0
  %v186 = vlog2.pop %v185
  %v187 = vmul.f32 %v186, 0.6931472
  %v188 = vmul.f32 -0.5, %v129
  %v189 = vadd.f32 %v188, 1.0
  %v190 = vmul.f32 %v189, %v129
  %v191 = vand.u32 2147483647, %v129
  %vm192 = vcmp.lt.f32.partialorder %v191, 0.0004427343
  %v193 = vsel %vm192, %v190, %v187
  %v194 = vadd.f32 %v130, 1.0
  %v195 = vlog2.pop %v194
  %v196 = vmul.f32 %v195, 0.6931472
  %v197 = vmul.f32 -0.5, %v130
  %v198 = vadd.f32 %v197, 1.0
  %v199 = vmul.f32 %v198, %v130
  %v200 = vand.u32 2147483647, %v130
  %vm201 = vcmp.lt.f32.partialorder %v200, 0.0004427343
  %v202 = vsel %vm201, %v199, %v196
  %v203 = vmul.f32 %v139, -2.5
  %v204 = vmul.f32 %v148, -2.5
  %v205 = vmul.f32 %v157, -2.5
  %v206 = vmul.f32 %v166, -2.5
  %v207 = vmul.f32 %v175, -2.5
  %v208 = vmul.f32 %v184, -2.5
  %v209 = vmul.f32 %v193, -2.5
  %v210 = vmul.f32 %v202, -2.5
  %211 = vset.pattern.permute.xlu0 2
  %212 = vperm.xlu0 %211, %v19
  %v213 = vpop.permute.xlu0 %212
  %215 = vset.pattern.permute.xlu0 2
  %216 = vperm.xlu0 %215, %v20
  %v217 = vpop.permute.xlu0 %216
  %219 = vset.pattern.permute.xlu0 2
  %220 = vperm.xlu0 %219, %v21
  %v221 = vpop.permute.xlu0 %220
  %223 = vset.pattern.permute.xlu0 2
  %224 = vperm.xlu0 %223, %v22
  %v225 = vpop.permute.xlu0 %224
  %227 = vset.pattern.permute.xlu0 2
  %228 = vperm.xlu0 %227, %v23
  %v229 = vpop.permute.xlu0 %228
  %231 = vset.pattern.permute.xlu0 2
  %232 = vperm.xlu0 %231, %v24
  %v233 = vpop.permute.xlu0 %232
  %235 = vset.pattern.permute.xlu0 2
  %236 = vperm.xlu0 %235, %v25
  %v237 = vpop.permute.xlu0 %236
  %239 = vset.pattern.permute.xlu0 2
  %240 = vperm.xlu0 %239, %v26
  %v241 = vpop.permute.xlu0 %240
  %v243 = vadd.f32 %v203, %v213
  %v244 = vadd.f32 %v204, %v217
  %v245 = vadd.f32 %v205, %v221
  %v246 = vadd.f32 %v206, %v225
  %v247 = vadd.f32 %v207, %v229
  %v248 = vadd.f32 %v208, %v233
  %v249 = vadd.f32 %v209, %v237
  %v250 = vadd.f32 %v210, %v241
  %vm251 = vcmask 130048
  %252 = vst.msk [vmem:[%s2] sm:$0xff] %vm251, %v243
  %253 = vst.msk [vmem:[%s2 + $0x8] sm:$0xff] %vm251, %v244
  %254 = vst.msk [vmem:[%s2 + $0x10] sm:$0xff] %vm251, %v245
  %255 = vst.msk [vmem:[%s2 + $0x18] sm:$0xff] %vm251, %v246
  %256 = vst.msk [vmem:[%s2 + $0x20] sm:$0xff] %vm251, %v247
  %257 = vst.msk [vmem:[%s2 + $0x28] sm:$0xff] %vm251, %v248
  %258 = vst.msk [vmem:[%s2 + $0x30] sm:$0xff] %vm251, %v249
  %259 = vst.msk [vmem:[%s2 + $0x38] sm:$0xff] %vm251, %v250
  // Predicated region
  $region10: #{tpu_custom_call.1} parent=0 // pred_check
    _
  $region11: #{tpu_custom_call.1} parent=0 // pred_check_branch
    %261 = sbr.rel (0) target = $region13
  $region12: #{tpu_custom_call.1} parent=0 // pred_region
    _
  $region13: #{tpu_custom_call.1} parent=0 // pred_fallthru
    _
  // Predicated region
  $region14: #{tpu_custom_call.1} parent=0 // pred_check
    _
  $region15: #{tpu_custom_call.1} parent=0 // pred_check_branch
    %263 = sbr.rel (0) target = $region17
  $region16: #{tpu_custom_call.1} parent=0 // pred_region
    _
  $region17: #{tpu_custom_call.1} parent=0 // pred_fallthru
    _

</llo_original>
